<compile_context>
chip_gen: v7x
topology: tpu7x:2x2x1
jax: 0.10.0
libtpu: 0.0.40
codegen_flags: <defaults>
</compile_context>

<pallas_src>
import math

import jax
import jax.numpy as jnp
from jax.experimental import pallas as pl
from jax.experimental.pallas import tpu as pltpu

STATE_DIM = 288
ACTION_DIM = 12
IN_DIM = STATE_DIM + ACTION_DIM   # 300 (reference / init only)
HID_DIM = 256
OUT_DIM = 288

_ROW_ALIGN = 16                   # bf16-friendly sublane multiple


def icm_forward_kernel(x_ref, a_ref, w1s_ref, w1a_ref, b1_ref, w2_ref, b2_ref,
                       o_ref):
    # x_ref:  (tb, 288) f32      a_ref:  (tb, 1) int32
    # w1s_ref:(288, 256) cdt     w1a_ref:(12, 256) cdt    b1_ref: (1, 256) f32
    # w2_ref: (256, 288) cdt     b2_ref: (1, 288) f32     o_ref:  (tb, 288)
    cdt = w1s_ref.dtype
    tb = x_ref.shape[0]

    # Cast activations in-kernel (free under MXU/DMA slack; avoids a wrapper
    # astype pass over the (B, 288) state).
    x = x_ref[...].astype(cdt)

    # One-hot of the action built in-registers; its W1 contribution is a tiny
    # (tb, 12) @ (12, 256) MXU dot against the resident action-weight table.
    onehot = (jax.lax.broadcasted_iota(jnp.int32, (tb, ACTION_DIM), 1)
              == a_ref[...]).astype(cdt)

    h = (jnp.dot(x, w1s_ref[...], preferred_element_type=jnp.float32)
         + jnp.dot(onehot, w1a_ref[...], preferred_element_type=jnp.float32)
         + b1_ref[...])
    h = jnp.maximum(h, 0.0)                                   # f32 ReLU (VPU)

    y = jnp.dot(h.astype(cdt), w2_ref[...],
                preferred_element_type=jnp.float32) + b2_ref[...]
    o_ref[...] = y.astype(o_ref.dtype)


def prepare_params(params, compute_dtype=jnp.bfloat16):
    """One-time cast/split of the weights (cache this; do NOT redo per step).

    W1 is stored as (300, 256); split into the state part (288, 256) and the
    action part (12, 256) so concat(state, onehot) @ W1 becomes
    state @ W1s + onehot @ W1a — no (B, 300) concat, no K=300 padding.
    """
    w1, b1, w2, b2 = params
    return dict(
        w1_state=w1[:STATE_DIM].astype(compute_dtype),        # (288, 256)
        w1_action=w1[STATE_DIM:].astype(compute_dtype),        # (12, 256)
        b1=b1.reshape(1, HID_DIM).astype(jnp.float32),         # (1, 256)
        w2=w2.astype(compute_dtype),                           # (256, 288)
        b2=b2.reshape(1, OUT_DIM).astype(jnp.float32),         # (1, 288)
    )


def icm_forward(state, action, prep, *, tile_b=1024, out_dtype=jnp.float32):
    """state: (B, 288) f32; action: (B, 1) or (B,) integer in [0, 12)."""
    B = state.shape[0]
    act = action.reshape(B, 1).astype(jnp.int32)

    w1s, w1a, b1, w2, b2 = (prep["w1_state"], prep["w1_action"], prep["b1"],
                            prep["w2"], prep["b2"])

    def round_up(x, m):
        return ((x + m - 1) // m) * m

    # Batch tiling. Rows aligned to 16 (bf16 packing). No padding of the
    # arrays themselves — the last grid step is a masked partial block.
    b_align = round_up(B, _ROW_ALIGN)
    tb = min(round_up(tile_b, _ROW_ALIGN), b_align)
    # v7x megacore: guarantee >= 2 grid steps when the batch permits so the
    # "parallel" axis shards across both TensorCores (neutral on 1-TC chips).
    if b_align >= 2 * _ROW_ALIGN and pl.cdiv(b_align, tb) < 2:
        tb = round_up(pl.cdiv(b_align, 2), _ROW_ALIGN)
    n_tiles = pl.cdiv(B, tb)

    cdt_size = jnp.dtype(w1s.dtype).itemsize
    flops = 2 * B * (STATE_DIM * HID_DIM + ACTION_DIM * HID_DIM
                     + HID_DIM * OUT_DIM)
    bytes_accessed = (B * STATE_DIM * 4 + B * 4
                      + (STATE_DIM + ACTION_DIM) * HID_DIM * cdt_size
                      + HID_DIM * OUT_DIM * cdt_size
                      + (HID_DIM + OUT_DIM) * 4
                      + B * OUT_DIM * jnp.dtype(out_dtype).itemsize)

    # Note: at tb <= 1024 the double-buffered blocks + resident weights are
    # ~5 MiB, inside every generation's scoped-VMEM default (v5e 16 MiB,
    # v6e/v7x 32 MiB); set vmem_limit_bytes only if tile_b is pushed past ~2048.
    out = pl.pallas_call(
        icm_forward_kernel,
        out_shape=jax.ShapeDtypeStruct((B, OUT_DIM), out_dtype),
        grid=(n_tiles,),
        in_specs=[
            pl.BlockSpec((tb, STATE_DIM), lambda i: (i, 0)),        # state tile
            pl.BlockSpec((tb, 1), lambda i: (i, 0)),                # action ids
            pl.BlockSpec((STATE_DIM, HID_DIM), lambda i: (0, 0)),   # W1[:288]
            pl.BlockSpec((ACTION_DIM, HID_DIM), lambda i: (0, 0)),  # W1[288:]
            pl.BlockSpec((1, HID_DIM), lambda i: (0, 0)),           # b1
            pl.BlockSpec((HID_DIM, OUT_DIM), lambda i: (0, 0)),     # W2
            pl.BlockSpec((1, OUT_DIM), lambda i: (0, 0)),           # b2
        ],
        out_specs=pl.BlockSpec((tb, OUT_DIM), lambda i: (i, 0)),
        compiler_params=pltpu.CompilerParams(
            dimension_semantics=("parallel",)),
        cost_estimate=pl.CostEstimate(
            flops=flops, transcendentals=0, bytes_accessed=bytes_accessed),
    )(state, act, w1s, w1a, b1, w2, b2)

    return out


def init_params(key):
    """Deterministic init mimicking nn.Linear's U(-1/sqrt(fan_in), 1/sqrt(fan_in))."""
    k1, k2, k3, k4 = jax.random.split(key, 4)
    bound1 = 1.0 / math.sqrt(IN_DIM)
    bound2 = 1.0 / math.sqrt(HID_DIM)
    # Stored as (in, out) so the kernel does x @ W directly.
    w1 = jax.random.uniform(k1, (IN_DIM, HID_DIM), jnp.float32, -bound1, bound1)
    b1 = jax.random.uniform(k2, (HID_DIM,), jnp.float32, -bound1, bound1)
    w2 = jax.random.uniform(k3, (HID_DIM, OUT_DIM), jnp.float32, -bound2, bound2)
    b2 = jax.random.uniform(k4, (OUT_DIM,), jnp.float32, -bound2, bound2)
    return w1, b1, w2, b2


def icm_forward_ref(state, action, params):
    """Pure-JAX reference (matches the PyTorch forward)."""
    w1, b1, w2, b2 = params
    act = jnp.squeeze(action, axis=-1) if action.ndim > 1 else action
    x = jnp.concatenate(
        [state, jax.nn.one_hot(act, ACTION_DIM, dtype=state.dtype)], axis=1)
    h = jnp.maximum(x @ w1 + b1, 0.0)
    return h @ w2 + b2


if __name__ == "__main__":
    key = jax.random.PRNGKey(0)
    k_state, k_action, k_params = jax.random.split(key, 3)

    B = 2
    state = jax.random.normal(k_state, (B, STATE_DIM), jnp.float32)
    action = jax.random.randint(k_action, (B, 1), 0, ACTION_DIM, dtype=jnp.int32)
    params = init_params(k_params)

    y_ref = icm_forward_ref(state, action, params)

    # f32-operand path: the algebraic one-hot fold is exact -> tight check.
    prep_f32 = prepare_params(params, compute_dtype=jnp.float32)
    y_f32 = jax.block_until_ready(icm_forward(state, action, prep_f32))
    assert y_f32.shape == (B, OUT_DIM)
    assert jnp.allclose(y_f32, y_ref, atol=1e-4, rtol=1e-4), "f32 mismatch"

    # Default bf16-operand path (f32 MXU accumulation) — looser tolerance.
    prep_bf16 = prepare_params(params)                    # bf16 by default
    y_bf16 = jax.block_until_ready(icm_forward(state, action, prep_bf16))
    assert y_bf16.shape == (B, OUT_DIM)
    assert jnp.allclose(y_bf16, y_ref, atol=5e-2, rtol=5e-2), "bf16 mismatch"

    print("KERNEL_OK")
</pallas_src>

<mosaic_0001>
module attributes {stable_mosaic.version = 11 : i64} {
  func.func @icm_forward_kernel(%arg0: i32, %arg1: memref<16x288xf32, #tpu.memory_space<vmem>>, %arg2: memref<16x1xi32, #tpu.memory_space<vmem>>, %arg3: memref<288x256xf32, #tpu.memory_space<vmem>>, %arg4: memref<12x256xf32, #tpu.memory_space<vmem>>, %arg5: memref<1x256xf32, #tpu.memory_space<vmem>>, %arg6: memref<256x288xf32, #tpu.memory_space<vmem>>, %arg7: memref<1x288xf32, #tpu.memory_space<vmem>>, %arg8: memref<16x288xf32, #tpu.memory_space<vmem>>) attributes {dimension_semantics = [#tpu.dimension_semantics<parallel>], iteration_bounds = array<i64: 1>, scalar_prefetch = 0 : i64, scratch_operands = 0 : i64, tpu.core_type = #tpu.core_type<tc>, window_params = [{transform_indices = @transform_0, window_bounds = array<i64: 16, 288>}, {transform_indices = @transform_1, window_bounds = array<i64: 16, 1>}, {pipeline_mode = #tpu.pipeline_mode<synchronous>, transform_indices = @transform_2, window_bounds = array<i64: 288, 256>}, {pipeline_mode = #tpu.pipeline_mode<synchronous>, transform_indices = @transform_3, window_bounds = array<i64: 12, 256>}, {pipeline_mode = #tpu.pipeline_mode<synchronous>, transform_indices = @transform_4, window_bounds = array<i64: 1, 256>}, {pipeline_mode = #tpu.pipeline_mode<synchronous>, transform_indices = @transform_5, window_bounds = array<i64: 256, 288>}, {pipeline_mode = #tpu.pipeline_mode<synchronous>, transform_indices = @transform_6, window_bounds = array<i64: 1, 288>}, {transform_indices = @transform_7, window_bounds = array<i64: 16, 288>}]} {
    %c0 = arith.constant 0 : index
    %c0_0 = arith.constant 0 : index
    %0 = vector.load %arg1[%c0, %c0_0] : memref<16x288xf32, #tpu.memory_space<vmem>>, vector<16x288xf32>
    %1 = tpu.iota {dimensions = array<i32: 1>} : vector<16x12xi32>
    %c0_1 = arith.constant 0 : index
    %c0_2 = arith.constant 0 : index
    %2 = vector.load %arg2[%c0_1, %c0_2] : memref<16x1xi32, #tpu.memory_space<vmem>>, vector<16x1xi32>
    %3 = vector.broadcast %2 : vector<16x1xi32> to vector<16x12xi32>
    %4 = arith.cmpi eq, %1, %3 : vector<16x12xi32>
    %5 = arith.extui %4 : vector<16x12xi1> to vector<16x12xi32>
    %6 = arith.sitofp %5 : vector<16x12xi32> to vector<16x12xf32>
    %c0_3 = arith.constant 0 : index
    %c0_4 = arith.constant 0 : index
    %7 = vector.load %arg3[%c0_3, %c0_4] : memref<288x256xf32, #tpu.memory_space<vmem>>, vector<288x256xf32>
    %cst = arith.constant dense<0.000000e+00> : vector<16x256xf32>
    %8 = tpu.matmul %0, %7, %cst {dimension_numbers = #tpu.dot_dimension_numbers<[1], [0], [0], [1], [0, 0, 1, 1], [], []>} : vector<16x288xf32>, vector<288x256xf32>, vector<16x256xf32> -> vector<16x256xf32>
    %c0_5 = arith.constant 0 : index
    %c0_6 = arith.constant 0 : index
    %9 = vector.load %arg4[%c0_5, %c0_6] : memref<12x256xf32, #tpu.memory_space<vmem>>, vector<12x256xf32>
    %cst_7 = arith.constant dense<0.000000e+00> : vector<16x256xf32>
    %10 = tpu.matmul %6, %9, %cst_7 {dimension_numbers = #tpu.dot_dimension_numbers<[1], [0], [0], [1], [0, 0, 1, 1], [], []>} : vector<16x12xf32>, vector<12x256xf32>, vector<16x256xf32> -> vector<16x256xf32>
    %11 = arith.addf %8, %10 : vector<16x256xf32>
    %c0_8 = arith.constant 0 : index
    %c0_9 = arith.constant 0 : index
    %12 = vector.load %arg5[%c0_8, %c0_9] : memref<1x256xf32, #tpu.memory_space<vmem>>, vector<1x256xf32>
    %13 = vector.broadcast %12 : vector<1x256xf32> to vector<16x256xf32>
    %14 = arith.addf %11, %13 : vector<16x256xf32>
    %cst_10 = arith.constant 0.000000e+00 : f32
    %15 = vector.broadcast %cst_10 : f32 to vector<16x256xf32>
    %16 = arith.maximumf %14, %15 : vector<16x256xf32>
    %c0_11 = arith.constant 0 : index
    %c0_12 = arith.constant 0 : index
    %17 = vector.load %arg6[%c0_11, %c0_12] : memref<256x288xf32, #tpu.memory_space<vmem>>, vector<256x288xf32>
    %cst_13 = arith.constant dense<0.000000e+00> : vector<16x288xf32>
    %18 = tpu.matmul %16, %17, %cst_13 {dimension_numbers = #tpu.dot_dimension_numbers<[1], [0], [0], [1], [0, 0, 1, 1], [], []>} : vector<16x256xf32>, vector<256x288xf32>, vector<16x288xf32> -> vector<16x288xf32>
    %c0_14 = arith.constant 0 : index
    %c0_15 = arith.constant 0 : index
    %19 = vector.load %arg7[%c0_14, %c0_15] : memref<1x288xf32, #tpu.memory_space<vmem>>, vector<1x288xf32>
    %20 = vector.broadcast %19 : vector<1x288xf32> to vector<16x288xf32>
    %21 = arith.addf %18, %20 : vector<16x288xf32>
    %c0_16 = arith.constant 0 : index
    %c0_17 = arith.constant 0 : index
    %22 = vector.load %arg8[%c0_16, %c0_17] : memref<16x288xf32, #tpu.memory_space<vmem>>, vector<16x288xf32>
    tpu.vector_store %arg8[%c0_16, %c0_17], %21 {strides = array<i32>} : memref<16x288xf32, #tpu.memory_space<vmem>>, vector<16x288xf32>,
    return
  }
  func.func @transform_0(%arg0: i32) -> (i32, i32) {
    %c0_i32 = arith.constant 0 : i32
    %c0_i32_0 = arith.constant 0 : i32
    return %arg0, %c0_i32 : i32, i32
  }
  func.func @transform_1(%arg0: i32) -> (i32, i32) {
    %c0_i32 = arith.constant 0 : i32
    %c0_i32_0 = arith.constant 0 : i32
    return %arg0, %c0_i32 : i32, i32
  }
  func.func @transform_2(%arg0: i32) -> (i32, i32) {
    %c0_i32 = arith.constant 0 : i32
    %c0_i32_0 = arith.constant 0 : i32
    %c0_i32_1 = arith.constant 0 : i32
    return %c0_i32, %c0_i32_0 : i32, i32
  }
  func.func @transform_3(%arg0: i32) -> (i32, i32) {
    %c0_i32 = arith.constant 0 : i32
    %c0_i32_0 = arith.constant 0 : i32
    %c0_i32_1 = arith.constant 0 : i32
    return %c0_i32, %c0_i32_0 : i32, i32
  }
  func.func @transform_4(%arg0: i32) -> (i32, i32) {
    %c0_i32 = arith.constant 0 : i32
    %c0_i32_0 = arith.constant 0 : i32
    %c0_i32_1 = arith.constant 0 : i32
    return %c0_i32, %c0_i32_0 : i32, i32
  }
  func.func @transform_5(%arg0: i32) -> (i32, i32) {
    %c0_i32 = arith.constant 0 : i32
    %c0_i32_0 = arith.constant 0 : i32
    %c0_i32_1 = arith.constant 0 : i32
    return %c0_i32, %c0_i32_0 : i32, i32
  }
  func.func @transform_6(%arg0: i32) -> (i32, i32) {
    %c0_i32 = arith.constant 0 : i32
    %c0_i32_0 = arith.constant 0 : i32
    %c0_i32_1 = arith.constant 0 : i32
    return %c0_i32, %c0_i32_0 : i32, i32
  }
  func.func @transform_7(%arg0: i32) -> (i32, i32) {
    %c0_i32 = arith.constant 0 : i32
    %c0_i32_0 = arith.constant 0 : i32
    return %arg0, %c0_i32 : i32, i32
  }
}

</mosaic_0001>

<llo_original>
// kernel: tpu_custom_call.1
$region0: #{tpu_custom_call.1}
  #allocation0 [shape = 'u32[]', space=smem, size = 0x4, offset = 0x4, fixed_abs, tag = 'smem constant byte address 0x4 - core index']
  #allocation1 [shape = 'u32[144,128]{1,0:T(1,128)}', space=vmem, size = 0x12000, scoped, tag = 'internal scratch']
  %s0 = inlined_call_operand.vmem [shape: f32[2,288], index: 0, kind: input, shape index: {}]
  %s1 = inlined_call_operand.vmem [shape: s32[2,1], index: 1, kind: input, shape index: {}]
  %s2 = inlined_call_operand.vmem [shape: f32[288,256], index: 2, kind: input, shape index: {}]
  %s3 = inlined_call_operand.vmem [shape: f32[12,256], index: 3, kind: input, shape index: {}]
  %s4 = inlined_call_operand.vmem [shape: f32[1,256], index: 4, kind: input, shape index: {}]
  %s5 = inlined_call_operand.vmem [shape: f32[256,288], index: 5, kind: input, shape index: {}]
  %s6 = inlined_call_operand.vmem [shape: f32[1,288], index: 6, kind: input, shape index: {}]
  %s7 = inlined_call_operand.hbm [shape: f32[2,288], index: 7, kind: output, shape index: {}]
  %s8 = sld [smem:[#allocation0]]
  $region38: #{tpu_custom_call.1} parent=0
    _
  %s10 = ssub.s32 1, %s8
  %s11 = scalar_select 0, %s10, %s8
  $region1: #{tpu_custom_call.1} parent=0
    #allocation2 [shape = 'u8[24576]{0}', space=vmem, size = 0x6000, scoped, tag = 'output window, operand 0, single buffered']
    #allocation3 [shape = 's32[1]{0}', space=sflag, size = 0x4, scoped, tag = 'scoped memory for tpu_custom_call.1']
    %12 = vsyncpa [#allocation3], 0
    // Predicated region
    $region2: #{tpu_custom_call.1} parent=1 // pred_check
      _
    $region3: #{tpu_custom_call.1} parent=1 // pred_check_branch
      %14 = sbr.rel (0) target = $region5
    $region4: #{tpu_custom_call.1} parent=1 // pred_region
      _
    $region5: #{tpu_custom_call.1} parent=1 // pred_fallthru
      _
    // Predicated region
    $region6: #{tpu_custom_call.1} parent=1 // pred_check
      _
    $region7: #{tpu_custom_call.1} parent=1 // pred_check_branch
      %16 = sbr.rel (0) target = $region9
    $region8: #{tpu_custom_call.1} parent=1 // pred_region
      _
    $region9: #{tpu_custom_call.1} parent=1 // pred_fallthru
      _
    // Predicated region
    $region10: #{tpu_custom_call.1} parent=1 // pred_check
      _
    $region11: #{tpu_custom_call.1} parent=1 // pred_check_branch
      %18 = sbr.rel (0) target = $region13
    $region12: #{tpu_custom_call.1} parent=1 // pred_region
      _
    $region13: #{tpu_custom_call.1} parent=1 // pred_fallthru
      _
    // Predicated region
    $region14: #{tpu_custom_call.1} parent=1 // pred_check
      _
    $region15: #{tpu_custom_call.1} parent=1 // pred_check_branch
      %20 = sbr.rel (0) target = $region17
    $region16: #{tpu_custom_call.1} parent=1 // pred_region
      _
    $region17: #{tpu_custom_call.1} parent=1 // pred_fallthru
      _
    // Predicated region
    $region18: #{tpu_custom_call.1} parent=1 // pred_check
      _
    $region19: #{tpu_custom_call.1} parent=1 // pred_check_branch
      %22 = sbr.rel (0) target = $region21
    $region20: #{tpu_custom_call.1} parent=1 // pred_region
      _
    $region21: #{tpu_custom_call.1} parent=1 // pred_fallthru
      _
    // Predicated region
    $region22: #{tpu_custom_call.1} parent=1 // pred_check
      _
    $region23: #{tpu_custom_call.1} parent=1 // pred_check_branch
      %24 = sbr.rel (0) target = $region25
    $region24: #{tpu_custom_call.1} parent=1 // pred_region
      _
    $region25: #{tpu_custom_call.1} parent=1 // pred_fallthru
      _
    // Predicated region
    $region26: #{tpu_custom_call.1} parent=1 // pred_check
      _
    $region27: #{tpu_custom_call.1} parent=1 // pred_check_branch
      %26 = sbr.rel (0) target = $region29
    $region28: #{tpu_custom_call.1} parent=1 // pred_region
      _
    $region29: #{tpu_custom_call.1} parent=1 // pred_fallthru
      _
    %v27 = vld [vmem:[%s0] sm:$0x3f]
    %v28 = vld [vmem:[%s0 + $0x6] sm:$0x3f]
    %v29 = vld [vmem:[%s0 + $0xc] sm:$0x3f]
    %v30 = vld [vmem:[%s0 + $0x12] sm:$0x3f]
    %v31 = vld [vmem:[%s0 + $0x18] sm:$0x3f]
    %v32 = vld [vmem:[%s0 + $0x1e] sm:$0x3f]
    %v33 = vld [vmem:[%s0 + $0x24] sm:$0x3f]
    %v34 = vld [vmem:[%s0 + $0x2a] sm:$0x3f]
    %v35 = vlaneseq
    %v36 = vand.u32 %v35, 127
    %v37 = vld [vmem:[%s1] sm:$0xff]
    %v38 = vld [vmem:[%s1 + $0x8] sm:$0xff]
    %39 = vset.pattern.permute.xlu0 0
    %40 = vperm.xlu0 %39, %v37
    %v41 = vpop.permute.xlu0 %40
    %42 = vset.pattern.permute.xlu0 0
    %43 = vperm.xlu0 %42, %v38
    %v44 = vpop.permute.xlu0 %43
    %vm45 = vcmp.eq.s32.totalorder %v36, %v41
    %vm46 = vcmp.eq.s32.totalorder %v36, %v44
    %v47 = vsel %vm45, 1, 0
    %v48 = vsel %vm46, 1, 0
    %v49 = vcvt.s32.f32 %v47
    %v50 = vcvt.s32.f32 %v48
    %v51 = vld [vmem:[%s2] sm:$0xff]
    %v52 = vld [vmem:[%s2 + $0x8] sm:$0xff]
    %v53 = vld [vmem:[%s2 + $0x10] sm:$0xff]
    %v54 = vld [vmem:[%s2 + $0x18] sm:$0xff]
    %v55 = vld [vmem:[%s2 + $0x20] sm:$0xff]
    %v56 = vld [vmem:[%s2 + $0x28] sm:$0xff]
    %v57 = vld [vmem:[%s2 + $0x30] sm:$0xff]
    %v58 = vld [vmem:[%s2 + $0x38] sm:$0xff]
    %v59 = vld [vmem:[%s2 + $0x40] sm:$0xff]
    %v60 = vld [vmem:[%s2 + $0x48] sm:$0xff]
    %v61 = vld [vmem:[%s2 + $0x50] sm:$0xff]
    %v62 = vld [vmem:[%s2 + $0x58] sm:$0xff]
    %v63 = vld [vmem:[%s2 + $0x60] sm:$0xff]
    %v64 = vld [vmem:[%s2 + $0x68] sm:$0xff]
    %v65 = vld [vmem:[%s2 + $0x70] sm:$0xff]
    %v66 = vld [vmem:[%s2 + $0x78] sm:$0xff]
    %v67 = vld [vmem:[%s2 + $0x80] sm:$0xff]
    %v68 = vld [vmem:[%s2 + $0x88] sm:$0xff]
    %v69 = vld [vmem:[%s2 + $0x90] sm:$0xff]
    %v70 = vld [vmem:[%s2 + $0x98] sm:$0xff]
    %v71 = vld [vmem:[%s2 + $0xa0] sm:$0xff]
    %v72 = vld [vmem:[%s2 + $0xa8] sm:$0xff]
    %v73 = vld [vmem:[%s2 + $0xb0] sm:$0xff]
    %v74 = vld [vmem:[%s2 + $0xb8] sm:$0xff]
    %v75 = vld [vmem:[%s2 + $0xc0] sm:$0xff]
    %v76 = vld [vmem:[%s2 + $0xc8] sm:$0xff]
    %v77 = vld [vmem:[%s2 + $0xd0] sm:$0xff]
    %v78 = vld [vmem:[%s2 + $0xd8] sm:$0xff]
    %v79 = vld [vmem:[%s2 + $0xe0] sm:$0xff]
    %v80 = vld [vmem:[%s2 + $0xe8] sm:$0xff]
    %v81 = vld [vmem:[%s2 + $0xf0] sm:$0xff]
    %v82 = vld [vmem:[%s2 + $0xf8] sm:$0xff]
    %v83 = vld [vmem:[%s2 + $0x100] sm:$0xff]
    %v84 = vld [vmem:[%s2 + $0x108] sm:$0xff]
    %v85 = vld [vmem:[%s2 + $0x110] sm:$0xff]
    %v86 = vld [vmem:[%s2 + $0x118] sm:$0xff]
    %v87 = vld [vmem:[%s2 + $0x120] sm:$0xff]
    %v88 = vld [vmem:[%s2 + $0x128] sm:$0xff]
    %v89 = vld [vmem:[%s2 + $0x130] sm:$0xff]
    %v90 = vld [vmem:[%s2 + $0x138] sm:$0xff]
    %v91 = vld [vmem:[%s2 + $0x140] sm:$0xff]
    %v92 = vld [vmem:[%s2 + $0x148] sm:$0xff]
    %v93 = vld [vmem:[%s2 + $0x150] sm:$0xff]
    %v94 = vld [vmem:[%s2 + $0x158] sm:$0xff]
    %v95 = vld [vmem:[%s2 + $0x160] sm:$0xff]
    %v96 = vld [vmem:[%s2 + $0x168] sm:$0xff]
    %v97 = vld [vmem:[%s2 + $0x170] sm:$0xff]
    %v98 = vld [vmem:[%s2 + $0x178] sm:$0xff]
    %v99 = vld [vmem:[%s2 + $0x180] sm:$0xff]
    %v100 = vld [vmem:[%s2 + $0x188] sm:$0xff]
    %v101 = vld [vmem:[%s2 + $0x190] sm:$0xff]
    %v102 = vld [vmem:[%s2 + $0x198] sm:$0xff]
    %v103 = vld [vmem:[%s2 + $0x1a0] sm:$0xff]
    %v104 = vld [vmem:[%s2 + $0x1a8] sm:$0xff]
    %v105 = vld [vmem:[%s2 + $0x1b0] sm:$0xff]
    %v106 = vld [vmem:[%s2 + $0x1b8] sm:$0xff]
    %v107 = vld [vmem:[%s2 + $0x1c0] sm:$0xff]
    %v108 = vld [vmem:[%s2 + $0x1c8] sm:$0xff]
    %v109 = vld [vmem:[%s2 + $0x1d0] sm:$0xff]
    %v110 = vld [vmem:[%s2 + $0x1d8] sm:$0xff]
    %v111 = vld [vmem:[%s2 + $0x1e0] sm:$0xff]
    %v112 = vld [vmem:[%s2 + $0x1e8] sm:$0xff]
    %v113 = vld [vmem:[%s2 + $0x1f0] sm:$0xff]
    %v114 = vld [vmem:[%s2 + $0x1f8] sm:$0xff]
    %v115 = vld [vmem:[%s2 + $0x200] sm:$0xff]
    %v116 = vld [vmem:[%s2 + $0x208] sm:$0xff]
    %v117 = vld [vmem:[%s2 + $0x210] sm:$0xff]
    %v118 = vld [vmem:[%s2 + $0x218] sm:$0xff]
    %v119 = vld [vmem:[%s2 + $0x220] sm:$0xff]
    %v120 = vld [vmem:[%s2 + $0x228] sm:$0xff]
    %v121 = vld [vmem:[%s2 + $0x230] sm:$0xff]
    %v122 = vld [vmem:[%s2 + $0x238] sm:$0xff]
    %v123 = vld [vmem:[%s3] sm:$0xff]
    %v124 = vld [vmem:[%s3 + $0x8] sm:$0xff]
    %v125 = vld [vmem:[%s3 + $0x10] sm:$0xf]
    %v126 = vld [vmem:[%s3 + $0x18] sm:$0xf]
    %vm127 = vcmask 97280
    %v129 = vsel %vm127, %v49, 0
    %v132 = vsel %vm127, %v50, 0
    %vm134 = vcmask 1043456
    %v136 = vsel %vm134, %v125, 0
    %v139 = vsel %vm134, %v126, 0
    %141 = vmatprep.subr.mxu0 %v124
    %142 = vmatpush1.msra.mxu0 %v123
    %143 = vmatprep.subr.mxu0 %v139
    %144 = vmatpush1.msra.mxu0 %v136
    %145 = vmatprep.subr.mxu0 0.0
    %146 = vmatpush1.msra.mxu0 0.0
    %147 = vmatprep.subr.mxu0 0.0
    %148 = vmatpush1.msra.mxu0 0.0
    %149 = vmatprep.subr.mxu0 0.0
    %150 = vmatpush1.msra.mxu0 0.0
    %151 = vmatprep.subr.mxu0 0.0
    %152 = vmatpush1.msra.mxu0 0.0
    %153 = vmatprep.subr.mxu0 0.0
    %154 = vmatpush1.msra.mxu0 0.0
    %155 = vmatprep.subr.mxu0 0.0
    %156 = vmatpush1.msra.mxu0 0.0
    %157 = vmatprep.subr.mxu0 0.0
    %158 = vmatpush1.msra.mxu0 0.0
    %159 = vmatprep.subr.mxu0 0.0
    %160 = vmatpush1.msra.mxu0 0.0
    %161 = vmatprep.subr.mxu0 0.0
    %162 = vmatpush1.msra.mxu0 0.0
    %163 = vmatprep.subr.mxu0 0.0
    %164 = vmatpush1.msra.mxu0 0.0
    %165 = vmatprep.subr.mxu0 0.0
    %166 = vmatpush1.msra.mxu0 0.0
    %167 = vmatprep.subr.mxu0 0.0
    %168 = vmatpush1.msra.mxu0 0.0
    %169 = vmatprep.subr.mxu0 0.0
    %170 = vmatpush1.msra.mxu0 0.0
    %171 = vmatprep.subr.mxu0 0.0
    %172 = vmatpush1.msra.mxu0 0.0
    %173 = vmatprep.subr.mxu0 0.0
    %174 = vmatpush1.msra.mxu0 0.0
    %175 = vmatprep.subr.mxu0 0.0
    %176 = vmatpush1.msra.mxu0 0.0
    %177 = vmatprep.subr.mxu0 0.0
    %178 = vmatpush1.msra.mxu0 0.0
    %179 = vmatprep.subr.mxu0 0.0
    %180 = vmatpush1.msra.mxu0 0.0
    %181 = vmatprep.subr.mxu0 0.0
    %182 = vmatpush1.msra.mxu0 0.0
    %183 = vmatprep.subr.mxu0 0.0
    %184 = vmatpush1.msra.mxu0 0.0
    %185 = vmatprep.subr.mxu0 0.0
    %186 = vmatpush1.msra.mxu0 0.0
    %187 = vmatprep.subr.mxu0 0.0
    %188 = vmatpush1.msra.mxu0 0.0
    %189 = vmatprep.subr.mxu0 0.0
    %190 = vmatpush1.msra.mxu0 0.0
    %191 = vmatprep.subr.mxu0 0.0
    %192 = vmatpush1.msra.mxu0 0.0
    %193 = vmatprep.subr.mxu0 0.0
    %194 = vmatpush1.msra.mxu0 0.0
    %195 = vmatprep.subr.mxu0 0.0
    %196 = vmatpush1.msra.mxu0 0.0
    %197 = vmatprep.subr.mxu0 0.0
    %198 = vmatpush1.msra.mxu0 0.0
    %199 = vmatprep.subr.mxu0 0.0
    %200 = vmatpush1.msra.mxu0 0.0
    %201 = vmatprep.subr.mxu0 0.0
    %202 = vmatpush1.msra.mxu0 0.0
    %203 = vmatprep.subr.mxu0 0.0
    %204 = vmatpush1.msra.mxu0 0.0
    %205 = vmatprep.mubr.f32.mxu0 0.0
    %206 = vmatmul.mubr.f32.gmra.mrb[0].mxu0 %v129
    %v207 = vpop.f32.mrb[0].mxu0
    %v208 = vadd.f32 0.0, %v207
    %v209 = vpop.f32.mrb[0].mxu0
    %v210 = vadd.f32 0.0, %v209
    %211 = vmatprep.mubr.f32.mxu0 0.0
    %212 = vmatmul.mubr.f32.gmra.mrb[0].mxu0 %v132
    %v213 = vpop.f32.mrb[0].mxu0
    %v214 = vadd.f32 0.0, %v213
    %v215 = vpop.f32.mrb[0].mxu0
    %v216 = vadd.f32 0.0, %v215
    %217 = vdwg.mxu0
    %v226 = vcombine.low %v27, %v28
    %v227 = vcombine.high %v27, %v28
    %v228 = vcombine.low %v29, %v30
    %v229 = vcombine.high %v29, %v30
    %v231 = vunpack.c.l.s4 1983009808
    %v232 = vunpack.c.0.s8 %v231
    %v233 = vlaneseq
    %v234 = vshrl.u32 %v233, 7
    %v235 = vsub.s32 %v232, %v234
    %v236 = vrot.slane %v226, %v235
    %v238 = vunpack.c.l.s4 1983009808
    %v239 = vunpack.c.0.s8 %v238
    %v240 = vlaneseq
    %v241 = vshrl.u32 %v240, 7
    %v242 = vsub.s32 %v239, %v241
    %v243 = vrot.slane %v227, %v242
    %v245 = vunpack.c.l.s4 1983009808
    %v246 = vunpack.c.0.s8 %v245
    %v247 = vlaneseq
    %v248 = vshrl.u32 %v247, 7
    %v249 = vsub.s32 %v246, %v248
    %v250 = vrot.slane %v228, %v249
    %v252 = vunpack.c.l.s4 1983009808
    %v253 = vunpack.c.0.s8 %v252
    %v254 = vlaneseq
    %v255 = vshrl.u32 %v254, 7
    %v256 = vsub.s32 %v253, %v255
    %v257 = vrot.slane %v229, %v256
    %v258 = vcombine.low %v236, %v250
    %v259 = vcombine.high %v236, %v250
    %v260 = vcombine.low %v243, %v257
    %v261 = vcombine.low %v31, %v32
    %v262 = vcombine.high %v31, %v32
    %v263 = vcombine.low %v33, %v34
    %v264 = vcombine.high %v33, %v34
    %v266 = vunpack.c.l.s4 1983009808
    %v267 = vunpack.c.0.s8 %v266
    %v268 = vlaneseq
    %v269 = vshrl.u32 %v268, 7
    %v270 = vsub.s32 %v267, %v269
    %v271 = vrot.slane %v261, %v270
    %v273 = vunpack.c.l.s4 1983009808
    %v274 = vunpack.c.0.s8 %v273
    %v275 = vlaneseq
    %v276 = vshrl.u32 %v275, 7
    %v277 = vsub.s32 %v274, %v276
    %v278 = vrot.slane %v262, %v277
    %v280 = vunpack.c.l.s4 1983009808
    %v281 = vunpack.c.0.s8 %v280
    %v282 = vlaneseq
    %v283 = vshrl.u32 %v282, 7
    %v284 = vsub.s32 %v281, %v283
    %v285 = vrot.slane %v263, %v284
    %v287 = vunpack.c.l.s4 1983009808
    %v288 = vunpack.c.0.s8 %v287
    %v289 = vlaneseq
    %v290 = vshrl.u32 %v289, 7
    %v291 = vsub.s32 %v288, %v290
    %v292 = vrot.slane %v264, %v291
    %v293 = vcombine.low %v271, %v285
    %v294 = vcombine.high %v271, %v285
    %v295 = vcombine.low %v278, %v292
    %vm300 = vcmask 261120
    %v301 = vsel %vm300, %v260, 0
    %v303 = vsel %vm300, %v295, 0
    %305 = vmatprep.subr.mxu0 %v52
    %306 = vmatpush1.msra.mxu0 %v51
    %307 = vmatprep.subr.mxu0 %v54
    %308 = vmatpush1.msra.mxu0 %v53
    %309 = vmatprep.subr.mxu0 %v56
    %310 = vmatpush1.msra.mxu0 %v55
    %311 = vmatprep.subr.mxu0 %v58
    %312 = vmatpush1.msra.mxu0 %v57
    %313 = vmatprep.subr.mxu0 %v60
    %314 = vmatpush1.msra.mxu0 %v59
    %315 = vmatprep.subr.mxu0 %v62
    %316 = vmatpush1.msra.mxu0 %v61
    %317 = vmatprep.subr.mxu0 %v64
    %318 = vmatpush1.msra.mxu0 %v63
    %319 = vmatprep.subr.mxu0 %v66
    %320 = vmatpush1.msra.mxu0 %v65
    %321 = vmatprep.subr.mxu0 %v68
    %322 = vmatpush1.msra.mxu0 %v67
    %323 = vmatprep.subr.mxu0 %v70
    %324 = vmatpush1.msra.mxu0 %v69
    %325 = vmatprep.subr.mxu0 %v72
    %326 = vmatpush1.msra.mxu0 %v71
    %327 = vmatprep.subr.mxu0 %v74
    %328 = vmatpush1.msra.mxu0 %v73
    %329 = vmatprep.subr.mxu0 %v76
    %330 = vmatpush1.msra.mxu0 %v75
    %331 = vmatprep.subr.mxu0 %v78
    %332 = vmatpush1.msra.mxu0 %v77
    %333 = vmatprep.subr.mxu0 %v80
    %334 = vmatpush1.msra.mxu0 %v79
    %335 = vmatprep.subr.mxu0 %v82
    %336 = vmatpush1.msra.mxu0 %v81
    %337 = vmatprep.subr.mxu0 %v84
    %338 = vmatpush1.msra.mxu0 %v83
    %339 = vmatprep.subr.mxu0 %v86
    %340 = vmatpush1.msra.mxu0 %v85
    %341 = vmatprep.subr.mxu0 %v88
    %342 = vmatpush1.msra.mxu0 %v87
    %343 = vmatprep.subr.mxu0 %v90
    %344 = vmatpush1.msra.mxu0 %v89
    %345 = vmatprep.subr.mxu0 %v92
    %346 = vmatpush1.msra.mxu0 %v91
    %347 = vmatprep.subr.mxu0 %v94
    %348 = vmatpush1.msra.mxu0 %v93
    %349 = vmatprep.subr.mxu0 %v96
    %350 = vmatpush1.msra.mxu0 %v95
    %351 = vmatprep.subr.mxu0 %v98
    %352 = vmatpush1.msra.mxu0 %v97
    %353 = vmatprep.subr.mxu0 %v100
    %354 = vmatpush1.msra.mxu0 %v99
    %355 = vmatprep.subr.mxu0 %v102
    %356 = vmatpush1.msra.mxu0 %v101
    %357 = vmatprep.subr.mxu0 %v104
    %358 = vmatpush1.msra.mxu0 %v103
    %359 = vmatprep.subr.mxu0 %v106
    %360 = vmatpush1.msra.mxu0 %v105
    %361 = vmatprep.subr.mxu0 %v108
    %362 = vmatpush1.msra.mxu0 %v107
    %363 = vmatprep.subr.mxu0 %v110
    %364 = vmatpush1.msra.mxu0 %v109
    %365 = vmatprep.subr.mxu0 %v112
    %366 = vmatpush1.msra.mxu0 %v111
    %367 = vmatprep.subr.mxu0 %v114
    %368 = vmatpush1.msra.mxu0 %v113
    %369 = vmatprep.mubr.f32.mxu0 %v259
    %370 = vmatmul.mubr.f32.gmra.mrb[0].mxu0 %v258
    %v371 = vpop.f32.mrb[0].mxu0
    %v372 = vadd.f32 %v208, %v371
    %v373 = vpop.f32.mrb[0].mxu0
    %v374 = vadd.f32 %v210, %v373
    %375 = vmatprep.mubr.f32.mxu0 %v294
    %376 = vmatmul.mubr.f32.gmra.mrb[0].mxu0 %v293
    %v377 = vpop.f32.mrb[0].mxu0
    %v378 = vadd.f32 %v214, %v377
    %v379 = vpop.f32.mrb[0].mxu0
    %v380 = vadd.f32 %v216, %v379
    %381 = vdwg.mxu0
    %382 = vmatprep.subr.mxu0 %v116
    %383 = vmatpush1.msra.mxu0 %v115
    %384 = vmatprep.subr.mxu0 %v118
    %385 = vmatpush1.msra.mxu0 %v117
    %386 = vmatprep.subr.mxu0 %v120
    %387 = vmatpush1.msra.mxu0 %v119
    %388 = vmatprep.subr.mxu0 %v122
    %389 = vmatpush1.msra.mxu0 %v121
    %390 = vmatprep.subr.mxu0 0.0
    %391 = vmatpush1.msra.mxu0 0.0
    %392 = vmatprep.subr.mxu0 0.0
    %393 = vmatpush1.msra.mxu0 0.0
    %394 = vmatprep.subr.mxu0 0.0
    %395 = vmatpush1.msra.mxu0 0.0
    %396 = vmatprep.subr.mxu0 0.0
    %397 = vmatpush1.msra.mxu0 0.0
    %398 = vmatprep.subr.mxu0 0.0
    %399 = vmatpush1.msra.mxu0 0.0
    %400 = vmatprep.subr.mxu0 0.0
    %401 = vmatpush1.msra.mxu0 0.0
    %402 = vmatprep.subr.mxu0 0.0
    %403 = vmatpush1.msra.mxu0 0.0
    %404 = vmatprep.subr.mxu0 0.0
    %405 = vmatpush1.msra.mxu0 0.0
    %406 = vmatprep.subr.mxu0 0.0
    %407 = vmatpush1.msra.mxu0 0.0
    %408 = vmatprep.subr.mxu0 0.0
    %409 = vmatpush1.msra.mxu0 0.0
    %410 = vmatprep.subr.mxu0 0.0
    %411 = vmatpush1.msra.mxu0 0.0
    %412 = vmatprep.subr.mxu0 0.0
    %413 = vmatpush1.msra.mxu0 0.0
    %414 = vmatprep.subr.mxu0 0.0
    %415 = vmatpush1.msra.mxu0 0.0
    %416 = vmatprep.subr.mxu0 0.0
    %417 = vmatpush1.msra.mxu0 0.0
    %418 = vmatprep.subr.mxu0 0.0
    %419 = vmatpush1.msra.mxu0 0.0
    %420 = vmatprep.subr.mxu0 0.0
    %421 = vmatpush1.msra.mxu0 0.0
    %422 = vmatprep.subr.mxu0 0.0
    %423 = vmatpush1.msra.mxu0 0.0
    %424 = vmatprep.subr.mxu0 0.0
    %425 = vmatpush1.msra.mxu0 0.0
    %426 = vmatprep.subr.mxu0 0.0
    %427 = vmatpush1.msra.mxu0 0.0
    %428 = vmatprep.subr.mxu0 0.0
    %429 = vmatpush1.msra.mxu0 0.0
    %430 = vmatprep.subr.mxu0 0.0
    %431 = vmatpush1.msra.mxu0 0.0
    %432 = vmatprep.subr.mxu0 0.0
    %433 = vmatpush1.msra.mxu0 0.0
    %434 = vmatprep.subr.mxu0 0.0
    %435 = vmatpush1.msra.mxu0 0.0
    %436 = vmatprep.subr.mxu0 0.0
    %437 = vmatpush1.msra.mxu0 0.0
    %438 = vmatprep.subr.mxu0 0.0
    %439 = vmatpush1.msra.mxu0 0.0
    %440 = vmatprep.subr.mxu0 0.0
    %441 = vmatpush1.msra.mxu0 0.0
    %442 = vmatprep.subr.mxu0 0.0
    %443 = vmatpush1.msra.mxu0 0.0
    %444 = vmatprep.subr.mxu0 0.0
    %445 = vmatpush1.msra.mxu0 0.0
    %446 = vmatprep.mubr.f32.mxu0 0.0
    %447 = vmatmul.mubr.f32.gmra.mrb[0].mxu0 %v301
    %v448 = vpop.f32.mrb[0].mxu0
    %v449 = vadd.f32 %v372, %v448
    %v450 = vpop.f32.mrb[0].mxu0
    %v451 = vadd.f32 %v374, %v450
    %452 = vmatprep.mubr.f32.mxu0 0.0
    %453 = vmatmul.mubr.f32.gmra.mrb[0].mxu0 %v303
    %v454 = vpop.f32.mrb[0].mxu0
    %v455 = vadd.f32 %v378, %v454
    %v456 = vpop.f32.mrb[0].mxu0
    %v457 = vadd.f32 %v380, %v456
    %458 = vdwg.mxu0
    %v459 = vld [vmem:[%s4] sm:$0x3]
    %v461 = vlaneseq
    %v462 = vshrl.u32 %v461, 7
    %v463 = vsub.s32 0, %v462
    %v464 = vrot.slane %v459, %v463
    %v465 = vlaneseq
    %v466 = vshrl.u32 %v465, 7
    %v467 = vsub.s32 1, %v466
    %v468 = vrot.slane %v459, %v467
    %v471 = vadd.f32 %v449, %v464
    %v472 = vadd.f32 %v451, %v468
    %v473 = vadd.f32 %v455, %v464
    %v474 = vadd.f32 %v457, %v468
    %v475 = vmax.f32 %v471, 0.0
    %v476 = vmax.f32 %v472, 0.0
    %v477 = vmax.f32 %v473, 0.0
    %v478 = vmax.f32 %v474, 0.0
    %v479 = vld [vmem:[%s5] sm:$0xff]
    %v480 = vld [vmem:[%s5 + $0x8] sm:$0xff]
    %v481 = vld [vmem:[%s5 + $0x10] sm:$0xff]
    %v482 = vld [vmem:[%s5 + $0x18] sm:$0xff]
    %v483 = vld [vmem:[%s5 + $0x20] sm:$0xff]
    %v484 = vld [vmem:[%s5 + $0x28] sm:$0xff]
    %v485 = vld [vmem:[%s5 + $0x30] sm:$0xff]
    %v486 = vld [vmem:[%s5 + $0x38] sm:$0xff]
    %v487 = vld [vmem:[%s5 + $0x40] sm:$0xff]
    %v488 = vld [vmem:[%s5 + $0x48] sm:$0xff]
    %v489 = vld [vmem:[%s5 + $0x50] sm:$0xff]
    %v490 = vld [vmem:[%s5 + $0x58] sm:$0xff]
    %v491 = vld [vmem:[%s5 + $0x60] sm:$0xff]
    %v492 = vld [vmem:[%s5 + $0x68] sm:$0xff]
    %v493 = vld [vmem:[%s5 + $0x70] sm:$0xff]
    %v494 = vld [vmem:[%s5 + $0x78] sm:$0xff]
    %v495 = vld [vmem:[%s5 + $0x80] sm:$0xff]
    %v496 = vld [vmem:[%s5 + $0x88] sm:$0xff]
    %v497 = vld [vmem:[%s5 + $0x90] sm:$0xff]
    %v498 = vld [vmem:[%s5 + $0x98] sm:$0xff]
    %v499 = vld [vmem:[%s5 + $0xa0] sm:$0xff]
    %v500 = vld [vmem:[%s5 + $0xa8] sm:$0xff]
    %v501 = vld [vmem:[%s5 + $0xb0] sm:$0xff]
    %v502 = vld [vmem:[%s5 + $0xb8] sm:$0xff]
    %v503 = vld [vmem:[%s5 + $0xc0] sm:$0xff]
    %v504 = vld [vmem:[%s5 + $0xc8] sm:$0xff]
    %v505 = vld [vmem:[%s5 + $0xd0] sm:$0xff]
    %v506 = vld [vmem:[%s5 + $0xd8] sm:$0xff]
    %v507 = vld [vmem:[%s5 + $0xe0] sm:$0xff]
    %v508 = vld [vmem:[%s5 + $0xe8] sm:$0xff]
    %v509 = vld [vmem:[%s5 + $0xf0] sm:$0xff]
    %v510 = vld [vmem:[%s5 + $0xf8] sm:$0xff]
    %v511 = vld [vmem:[%s5 + $0x100] sm:$0xff]
    %v512 = vld [vmem:[%s5 + $0x108] sm:$0xff]
    %v513 = vld [vmem:[%s5 + $0x110] sm:$0xff]
    %v514 = vld [vmem:[%s5 + $0x118] sm:$0xff]
    %v515 = vld [vmem:[%s5 + $0x120] sm:$0xff]
    %v516 = vld [vmem:[%s5 + $0x128] sm:$0xff]
    %v517 = vld [vmem:[%s5 + $0x130] sm:$0xff]
    %v518 = vld [vmem:[%s5 + $0x138] sm:$0xff]
    %v519 = vld [vmem:[%s5 + $0x140] sm:$0xff]
    %v520 = vld [vmem:[%s5 + $0x148] sm:$0xff]
    %v521 = vld [vmem:[%s5 + $0x150] sm:$0xff]
    %v522 = vld [vmem:[%s5 + $0x158] sm:$0xff]
    %v523 = vld [vmem:[%s5 + $0x160] sm:$0xff]
    %v524 = vld [vmem:[%s5 + $0x168] sm:$0xff]
    %v525 = vld [vmem:[%s5 + $0x170] sm:$0xff]
    %v526 = vld [vmem:[%s5 + $0x178] sm:$0xff]
    %v527 = vld [vmem:[%s5 + $0x180] sm:$0xff]
    %v528 = vld [vmem:[%s5 + $0x188] sm:$0xff]
    %v529 = vld [vmem:[%s5 + $0x190] sm:$0xff]
    %v530 = vld [vmem:[%s5 + $0x198] sm:$0xff]
    %v531 = vld [vmem:[%s5 + $0x1a0] sm:$0xff]
    %v532 = vld [vmem:[%s5 + $0x1a8] sm:$0xff]
    %v533 = vld [vmem:[%s5 + $0x1b0] sm:$0xff]
    %v534 = vld [vmem:[%s5 + $0x1b8] sm:$0xff]
    %v535 = vld [vmem:[%s5 + $0x1c0] sm:$0xff]
    %v536 = vld [vmem:[%s5 + $0x1c8] sm:$0xff]
    %v537 = vld [vmem:[%s5 + $0x1d0] sm:$0xff]
    %v538 = vld [vmem:[%s5 + $0x1d8] sm:$0xff]
    %v539 = vld [vmem:[%s5 + $0x1e0] sm:$0xff]
    %v540 = vld [vmem:[%s5 + $0x1e8] sm:$0xff]
    %v541 = vld [vmem:[%s5 + $0x1f0] sm:$0xff]
    %v542 = vld [vmem:[%s5 + $0x1f8] sm:$0xff]
    %v543 = vld [vmem:[%s5 + $0x200] sm:$0xff]
    %v544 = vld [vmem:[%s5 + $0x208] sm:$0xff]
    %v545 = vld [vmem:[%s5 + $0x210] sm:$0xff]
    %v546 = vld [vmem:[%s5 + $0x218] sm:$0xff]
    %v547 = vld [vmem:[%s5 + $0x220] sm:$0xff]
    %v548 = vld [vmem:[%s5 + $0x228] sm:$0xff]
    %v549 = vld [vmem:[%s5 + $0x230] sm:$0xff]
    %v550 = vld [vmem:[%s5 + $0x238] sm:$0xff]
    %v551 = vld [vmem:[%s5 + $0x240] sm:$0xff]
    %v552 = vld [vmem:[%s5 + $0x248] sm:$0xff]
    %v553 = vld [vmem:[%s5 + $0x250] sm:$0xff]
    %v554 = vld [vmem:[%s5 + $0x258] sm:$0xff]
    %v555 = vld [vmem:[%s5 + $0x260] sm:$0xff]
    %v556 = vld [vmem:[%s5 + $0x268] sm:$0xff]
    %v557 = vld [vmem:[%s5 + $0x270] sm:$0xff]
    %v558 = vld [vmem:[%s5 + $0x278] sm:$0xff]
    %v559 = vld [vmem:[%s5 + $0x280] sm:$0xff]
    %v560 = vld [vmem:[%s5 + $0x288] sm:$0xff]
    %v561 = vld [vmem:[%s5 + $0x290] sm:$0xff]
    %v562 = vld [vmem:[%s5 + $0x298] sm:$0xff]
    %v563 = vld [vmem:[%s5 + $0x2a0] sm:$0xff]
    %v564 = vld [vmem:[%s5 + $0x2a8] sm:$0xff]
    %v565 = vld [vmem:[%s5 + $0x2b0] sm:$0xff]
    %v566 = vld [vmem:[%s5 + $0x2b8] sm:$0xff]
    %v567 = vld [vmem:[%s5 + $0x2c0] sm:$0xff]
    %v568 = vld [vmem:[%s5 + $0x2c8] sm:$0xff]
    %v569 = vld [vmem:[%s5 + $0x2d0] sm:$0xff]
    %v570 = vld [vmem:[%s5 + $0x2d8] sm:$0xff]
    %v571 = vld [vmem:[%s5 + $0x2e0] sm:$0xff]
    %v572 = vld [vmem:[%s5 + $0x2e8] sm:$0xff]
    %v573 = vld [vmem:[%s5 + $0x2f0] sm:$0xff]
    %v574 = vld [vmem:[%s5 + $0x2f8] sm:$0xff]
    %v575 = vld [vmem:[%s6] sm:$0x7]
    %v577 = vlaneseq
    %v578 = vshrl.u32 %v577, 7
    %v579 = vsub.s32 0, %v578
    %v580 = vrot.slane %v575, %v579
    %v581 = vlaneseq
    %v582 = vshrl.u32 %v581, 7
    %v583 = vsub.s32 1, %v582
    %v584 = vrot.slane %v575, %v583
    %v585 = vlaneseq
    %v586 = vshrl.u32 %v585, 7
    %v587 = vsub.s32 2, %v586
    %v588 = vrot.slane %v575, %v587
    %592 = vmatprep.subr.mxu0 %v480
    %593 = vmatpush1.msra.mxu0 %v479
    %594 = vmatprep.subr.mxu0 %v483
    %595 = vmatpush1.msra.mxu0 %v482
    %596 = vmatprep.subr.mxu0 %v486
    %597 = vmatpush1.msra.mxu0 %v485
    %598 = vmatprep.subr.mxu0 %v489
    %599 = vmatpush1.msra.mxu0 %v488
    %600 = vmatprep.subr.mxu0 %v492
    %601 = vmatpush1.msra.mxu0 %v491
    %602 = vmatprep.subr.mxu0 %v495
    %603 = vmatpush1.msra.mxu0 %v494
    %604 = vmatprep.subr.mxu0 %v498
    %605 = vmatpush1.msra.mxu0 %v497
    %606 = vmatprep.subr.mxu0 %v501
    %607 = vmatpush1.msra.mxu0 %v500
    %608 = vmatprep.subr.mxu0 %v504
    %609 = vmatpush1.msra.mxu0 %v503
    %610 = vmatprep.subr.mxu0 %v507
    %611 = vmatpush1.msra.mxu0 %v506
    %612 = vmatprep.subr.mxu0 %v510
    %613 = vmatpush1.msra.mxu0 %v509
    %614 = vmatprep.subr.mxu0 %v513
    %615 = vmatpush1.msra.mxu0 %v512
    %616 = vmatprep.subr.mxu0 %v516
    %617 = vmatpush1.msra.mxu0 %v515
    %618 = vmatprep.subr.mxu0 %v519
    %619 = vmatpush1.msra.mxu0 %v518
    %620 = vmatprep.subr.mxu0 %v522
    %621 = vmatpush1.msra.mxu0 %v521
    %622 = vmatprep.subr.mxu0 %v525
    %623 = vmatpush1.msra.mxu0 %v524
    %624 = vmatprep.subr.mxu0 %v528
    %625 = vmatpush1.msra.mxu0 %v527
    %626 = vmatprep.subr.mxu0 %v531
    %627 = vmatpush1.msra.mxu0 %v530
    %628 = vmatprep.subr.mxu0 %v534
    %629 = vmatpush1.msra.mxu0 %v533
    %630 = vmatprep.subr.mxu0 %v537
    %631 = vmatpush1.msra.mxu0 %v536
    %632 = vmatprep.subr.mxu0 %v540
    %633 = vmatpush1.msra.mxu0 %v539
    %634 = vmatprep.subr.mxu0 %v543
    %635 = vmatpush1.msra.mxu0 %v542
    %636 = vmatprep.subr.mxu0 %v546
    %637 = vmatpush1.msra.mxu0 %v545
    %638 = vmatprep.subr.mxu0 %v549
    %639 = vmatpush1.msra.mxu0 %v548
    %640 = vmatprep.subr.mxu0 %v552
    %641 = vmatpush1.msra.mxu0 %v551
    %642 = vmatprep.subr.mxu0 %v555
    %643 = vmatpush1.msra.mxu0 %v554
    %644 = vmatprep.subr.mxu0 %v558
    %645 = vmatpush1.msra.mxu0 %v557
    %646 = vmatprep.subr.mxu0 %v561
    %647 = vmatpush1.msra.mxu0 %v560
    %648 = vmatprep.subr.mxu0 %v564
    %649 = vmatpush1.msra.mxu0 %v563
    %650 = vmatprep.subr.mxu0 %v567
    %651 = vmatpush1.msra.mxu0 %v566
    %652 = vmatprep.subr.mxu0 %v570
    %653 = vmatpush1.msra.mxu0 %v569
    %654 = vmatprep.subr.mxu0 %v573
    %655 = vmatpush1.msra.mxu0 %v572
    %656 = vmatprep.mubr.f32.mxu0 %v476
    %657 = vmatmul.mubr.f32.gmra.mrb[0].mxu0 %v475
    %v658 = vpop.f32.mrb[0].mxu0
    %v659 = vadd.f32 %v580, %v658
    %v660 = vpop.f32.mrb[0].mxu0
    %v661 = vadd.f32 %v584, %v660
    %662 = vmatprep.mubr.f32.mxu0 %v478
    %663 = vmatmul.mubr.f32.gmra.mrb[0].mxu0 %v477
    %v664 = vpop.f32.mrb[0].mxu0
    %v665 = vadd.f32 %v580, %v664
    %v666 = vpop.f32.mrb[0].mxu0
    %v667 = vadd.f32 %v584, %v666
    %668 = vdwg.mxu0
    %669 = vmatprep.subr.mxu0 0.0
    %670 = vmatpush1.msra.mxu0 %v481
    %671 = vmatprep.subr.mxu0 0.0
    %672 = vmatpush1.msra.mxu0 %v484
    %673 = vmatprep.subr.mxu0 0.0
    %674 = vmatpush1.msra.mxu0 %v487
    %675 = vmatprep.subr.mxu0 0.0
    %676 = vmatpush1.msra.mxu0 %v490
    %677 = vmatprep.subr.mxu0 0.0
    %678 = vmatpush1.msra.mxu0 %v493
    %679 = vmatprep.subr.mxu0 0.0
    %680 = vmatpush1.msra.mxu0 %v496
    %681 = vmatprep.subr.mxu0 0.0
    %682 = vmatpush1.msra.mxu0 %v499
    %683 = vmatprep.subr.mxu0 0.0
    %684 = vmatpush1.msra.mxu0 %v502
    %685 = vmatprep.subr.mxu0 0.0
    %686 = vmatpush1.msra.mxu0 %v505
    %687 = vmatprep.subr.mxu0 0.0
    %688 = vmatpush1.msra.mxu0 %v508
    %689 = vmatprep.subr.mxu0 0.0
    %690 = vmatpush1.msra.mxu0 %v511
    %691 = vmatprep.subr.mxu0 0.0
    %692 = vmatpush1.msra.mxu0 %v514
    %693 = vmatprep.subr.mxu0 0.0
    %694 = vmatpush1.msra.mxu0 %v517
    %695 = vmatprep.subr.mxu0 0.0
    %696 = vmatpush1.msra.mxu0 %v520
    %697 = vmatprep.subr.mxu0 0.0
    %698 = vmatpush1.msra.mxu0 %v523
    %699 = vmatprep.subr.mxu0 0.0
    %700 = vmatpush1.msra.mxu0 %v526
    %701 = vmatprep.subr.mxu0 0.0
    %702 = vmatpush1.msra.mxu0 %v529
    %703 = vmatprep.subr.mxu0 0.0
    %704 = vmatpush1.msra.mxu0 %v532
    %705 = vmatprep.subr.mxu0 0.0
    %706 = vmatpush1.msra.mxu0 %v535
    %707 = vmatprep.subr.mxu0 0.0
    %708 = vmatpush1.msra.mxu0 %v538
    %709 = vmatprep.subr.mxu0 0.0
    %710 = vmatpush1.msra.mxu0 %v541
    %711 = vmatprep.subr.mxu0 0.0
    %712 = vmatpush1.msra.mxu0 %v544
    %713 = vmatprep.subr.mxu0 0.0
    %714 = vmatpush1.msra.mxu0 %v547
    %715 = vmatprep.subr.mxu0 0.0
    %716 = vmatpush1.msra.mxu0 %v550
    %717 = vmatprep.subr.mxu0 0.0
    %718 = vmatpush1.msra.mxu0 %v553
    %719 = vmatprep.subr.mxu0 0.0
    %720 = vmatpush1.msra.mxu0 %v556
    %721 = vmatprep.subr.mxu0 0.0
    %722 = vmatpush1.msra.mxu0 %v559
    %723 = vmatprep.subr.mxu0 0.0
    %724 = vmatpush1.msra.mxu0 %v562
    %725 = vmatprep.subr.mxu0 0.0
    %726 = vmatpush1.msra.mxu0 %v565
    %727 = vmatprep.subr.mxu0 0.0
    %728 = vmatpush1.msra.mxu0 %v568
    %729 = vmatprep.subr.mxu0 0.0
    %730 = vmatpush1.msra.mxu0 %v571
    %731 = vmatprep.subr.mxu0 0.0
    %732 = vmatpush1.msra.mxu0 %v574
    %733 = vmatprep.mubr.f32.mxu0 %v476
    %734 = vmatmul.mubr.f32.gmra.mrb[0].mxu0 %v475
    %v735 = vpop.f32.mrb[0].mxu0
    %v736 = vadd.f32 %v588, %v735
    %v737 = vpop.f32.mrb[0].mxu0
    %738 = vmatprep.mubr.f32.mxu0 %v478
    %739 = vmatmul.mubr.f32.gmra.mrb[0].mxu0 %v477
    %v740 = vpop.f32.mrb[0].mxu0
    %v741 = vadd.f32 %v588, %v740
    %v742 = vpop.f32.mrb[0].mxu0
    %743 = vdwg.mxu0
    %v750 = vcombine.low %v659, %v661
    %v751 = vcombine.high %v659, %v661
    %v752 = vcombine.high %v736, %v736
    %v754 = vunpack.c.l.s4 1983009808
    %v755 = vunpack.c.0.s8 %v754
    %v756 = vlaneseq
    %v757 = vshrl.u32 %v756, 7
    %v758 = vsub.s32 %v755, %v757
    %v759 = vrot.slane %v750, %v758
    %v761 = vunpack.c.l.s4 1983009808
    %v762 = vunpack.c.0.s8 %v761
    %v763 = vlaneseq
    %v764 = vshrl.u32 %v763, 7
    %v765 = vsub.s32 %v762, %v764
    %v766 = vrot.slane %v751, %v765
    %v768 = vunpack.c.l.s4 1983009808
    %v769 = vunpack.c.0.s8 %v768
    %v770 = vlaneseq
    %v771 = vshrl.u32 %v770, 7
    %v772 = vsub.s32 %v769, %v771
    %v773 = vrot.slane %v736, %v772
    %v775 = vunpack.c.l.s4 1983009808
    %v776 = vunpack.c.0.s8 %v775
    %v777 = vlaneseq
    %v778 = vshrl.u32 %v777, 7
    %v779 = vsub.s32 %v776, %v778
    %v780 = vrot.slane %v752, %v779
    %v781 = vcombine.low %v759, %v773
    %v782 = vcombine.high %v759, %v773
    %v783 = vcombine.low %v766, %v780
    %v784 = vcombine.high %v766, %v780
    %v785 = vcombine.low %v665, %v667
    %v786 = vcombine.high %v665, %v667
    %v787 = vcombine.high %v741, %v741
    %v789 = vunpack.c.l.s4 1983009808
    %v790 = vunpack.c.0.s8 %v789
    %v791 = vlaneseq
    %v792 = vshrl.u32 %v791, 7
    %v793 = vsub.s32 %v790, %v792
    %v794 = vrot.slane %v785, %v793
    %v796 = vunpack.c.l.s4 1983009808
    %v797 = vunpack.c.0.s8 %v796
    %v798 = vlaneseq
    %v799 = vshrl.u32 %v798, 7
    %v800 = vsub.s32 %v797, %v799
    %v801 = vrot.slane %v786, %v800
    %v803 = vunpack.c.l.s4 1983009808
    %v804 = vunpack.c.0.s8 %v803
    %v805 = vlaneseq
    %v806 = vshrl.u32 %v805, 7
    %v807 = vsub.s32 %v804, %v806
    %v808 = vrot.slane %v741, %v807
    %v810 = vunpack.c.l.s4 1983009808
    %v811 = vunpack.c.0.s8 %v810
    %v812 = vlaneseq
    %v813 = vshrl.u32 %v812, 7
    %v814 = vsub.s32 %v811, %v813
    %v815 = vrot.slane %v787, %v814
    %v816 = vcombine.low %v794, %v808
    %v817 = vcombine.high %v794, %v808
    %v818 = vcombine.low %v801, %v815
    %v819 = vcombine.high %v801, %v815
    %vm828 = vcmask 1041408
    %vm829 = vcmask 1043458
    %vm830 = vmor %vm829, %vm828
    %vm831 = vcmask 259076
    %vm832 = vmor %vm831, %vm830
    %833 = vst.msk [vmem:[#allocation2] sm:$0x3f] %vm832, %v781
    %834 = vst.msk [vmem:[#allocation2 + $0x6] sm:$0x3f] %vm832, %v782
    %835 = vst.msk [vmem:[#allocation2 + $0xc] sm:$0x3f] %vm832, %v783
    %836 = vst.msk [vmem:[#allocation2 + $0x12] sm:$0x3f] %vm832, %v784
    %837 = vst.msk [vmem:[#allocation2 + $0x18] sm:$0x3f] %vm832, %v816
    %838 = vst.msk [vmem:[#allocation2 + $0x1e] sm:$0x3f] %vm832, %v817
    %839 = vst.msk [vmem:[#allocation2 + $0x24] sm:$0x3f] %vm832, %v818
    %840 = vst.msk [vmem:[#allocation2 + $0x2a] sm:$0x3f] %vm832, %v819
    // Predicated region
    $region30: #{tpu_custom_call.1} parent=1 // pred_check
      _
    $region31: #{tpu_custom_call.1} parent=1 // pred_check_branch
      %842 = sbr.rel (0) target = $region33
    $region32: #{tpu_custom_call.1} parent=1 // pred_region
      %s844 = ssub.s32 768, 96
      %845 = vsyncadd [#allocation3], %s844
      %s846 = sshll.u32 [#allocation2], 4
      %s847 = int_to_ptr.vmem [resolvable:$true] %s846
      %852 = dma.vmem_to_hbm [thread:$0]  %s847, 96, %s7, [#allocation3], 96, 96, 6
    $region33: #{tpu_custom_call.1} parent=1 // pred_fallthru
      _
    // Predicated region
    $region34: #{tpu_custom_call.1} parent=1 // pred_check
      _
    $region35: #{tpu_custom_call.1} parent=1 // pred_check_branch
      %854 = sbr.rel (0) target = $region37
    $region36: #{tpu_custom_call.1} parent=1 // pred_region
      %855 = dma.done [#allocation3], 768
    $region37: #{tpu_custom_call.1} parent=1 // pred_fallthru
      _
    %856 = vsyncpa [#allocation3], 1

</llo_original>
